<compile_context>
chip_gen: v7x
topology: tpu7x:2x2x1
jax: 0.10.0
libtpu: 0.0.40
codegen_flags: <defaults>
</compile_context>

<pallas_src>
import functools

import jax
import jax.numpy as jnp
from jax.experimental import pallas as pl
from jax.experimental.pallas import tpu as pltpu


# ----------------------------- small helpers -------------------------------

def _row_tile(m, max_tile=512):
    """Largest row tile dividing m (multiples of 8, good sublane alignment)."""
    for t in (512, 256, 128, 64, 32, 16, 8):
        if t <= max_tile and m % t == 0:
            return t
    return m


def _seq_tile(s, max_tile=256):
    """Query-row tile for the encoder grid."""
    for t in (256, 128, 64, 32, 16, 8):
        if t <= max_tile and s % t == 0:
            return t
    return s


def _ffn_chunk(i):
    """Chunk width over the FFN intermediate dim (caps live (tq, I) slab)."""
    for c in (1024, 512, 256):
        if i % c == 0:
            return c
    return i


def _layernorm_f32(x, gamma, beta, eps):
    mean = jnp.mean(x, axis=-1, keepdims=True)
    var = jnp.mean((x - mean) ** 2, axis=-1, keepdims=True)
    inv = jax.lax.rsqrt(var + eps)
    return (x - mean) * inv * gamma + beta


def _gelu_f32(y):
    # TODO(synk): tanh approximation of GELU; HF BERT default is exact erf GELU
    # (difference is tolerance-level).
    return 0.5 * y * (1.0 + jnp.tanh(0.7978845608028654 * (y + 0.044715 * y * y * y)))


@functools.lru_cache(maxsize=None)
def _vmem_limit_bytes():
    """Explicit scoped-VMEM limit with ~15% headroom under physical capacity
    (~110 MiB on v5e/v6e, ~54 MiB on v7x); defaults (16/32 MiB) are too small
    at real BERT sizes."""
    try:
        cap = pltpu.get_tpu_info().vmem_capacity_bytes
    except Exception:  # pragma: no cover - conservative fallback
        cap = 64 * 1024 * 1024
    return int(cap * 0.85)


def _probe_copy_kernel(x_ref, o_ref):
    o_ref[...] = x_ref[...]


@functools.lru_cache(maxsize=None)
def _single_buffer_supported():
    """Feature-detect pipeline_mode=pl.Buffered(1) (single-buffered constant
    weight blocks). Falls back to default double-buffering if unsupported."""
    try:
        spec = pl.BlockSpec((8, 128), lambda i: (0, 0),
                            pipeline_mode=pl.Buffered(1))
        f = pl.pallas_call(
            _probe_copy_kernel,
            out_shape=jax.ShapeDtypeStruct((8, 128), jnp.float32),
            grid=(1,),
            in_specs=[spec],
            out_specs=pl.BlockSpec((8, 128), lambda i: (0, 0)),
        )
        jax.block_until_ready(f(jnp.zeros((8, 128), jnp.float32)))
        return True
    except Exception:
        return False


def _weight_spec(shape):
    """Grid-constant weight block; single-buffered when supported (halves
    resident weight VMEM — most important inside v7x's 64 MiB budget)."""
    zeros = (0,) * len(shape)
    if _single_buffer_supported():
        return pl.BlockSpec(shape, lambda b, q: zeros,
                            pipeline_mode=pl.Buffered(1))
    return pl.BlockSpec(shape, lambda b, q: zeros)


def _const_spec(shape):
    zeros = (0,) * len(shape)
    return pl.BlockSpec(shape, lambda b, q: zeros)


# ----------------------------- Pallas kernels ------------------------------

def _layernorm_kernel(x_ref, g_ref, b_ref, o_ref, *, eps):
    x = x_ref[...].astype(jnp.float32)
    o_ref[...] = _layernorm_f32(x, g_ref[...], b_ref[...], eps).astype(o_ref.dtype)


def layernorm(x, gamma, beta, *, eps=1e-12, out_dtype=jnp.float32):
    """Row-tiled layernorm. x: (M, H); gamma, beta: (1, H) f32."""
    M, H = x.shape
    tm = _row_tile(M)
    return pl.pallas_call(
        functools.partial(_layernorm_kernel, eps=eps),
        out_shape=jax.ShapeDtypeStruct((M, H), out_dtype),
        grid=(M // tm,),
        in_specs=[
            pl.BlockSpec((tm, H), lambda i: (i, 0)),
            pl.BlockSpec((1, H), lambda i: (0, 0)),
            pl.BlockSpec((1, H), lambda i: (0, 0)),
        ],
        out_specs=pl.BlockSpec((tm, H), lambda i: (i, 0)),
        compiler_params=pltpu.CompilerParams(dimension_semantics=("parallel",)),
    )(x, gamma, beta)


def _encoder_layer_kernel(xq_ref, xkv_ref, mask_ref, wq_ref, bq_ref, wkv_ref,
                          bkv_ref, wo_ref, bo_ref, ln1_g_ref, ln1_b_ref,
                          w1_ref, b1_ref, w2_ref, b2_ref, ln2_g_ref, ln2_b_ref,
                          o_ref, kv_ref, *, n_heads, eps, ffn_chunk):
    tq = xq_ref.shape[1]
    S = xkv_ref.shape[1]
    H = xq_ref.shape[2]
    Dh = H // n_heads
    I = w1_ref.shape[1]
    scale = 1.0 / (Dh ** 0.5)

    # --- K/V for the whole sequence: computed once per batch element (first
    #     q-tile) and cached in VMEM scratch as bf16 (no f32 copy kept) ---
    @pl.when(pl.program_id(1) == 0)
    def _():
        xkv_bf = xkv_ref[0].astype(jnp.bfloat16)                    # (S, H)
        kv = jnp.dot(xkv_bf, wkv_ref[...],
                     preferred_element_type=jnp.float32) + bkv_ref[...]
        kv_ref[...] = kv.astype(jnp.bfloat16)                       # (S, 2H)

    xq = xq_ref[0]                                                  # (tq, H) f32 residual
    xq_bf = xq.astype(jnp.bfloat16)
    add_mask = mask_ref[0]                                          # (1, S) f32

    # --- Q projection for this q-tile: bias-add + bf16 cast fused ---
    q_bf = (jnp.dot(xq_bf, wq_ref[...], preferred_element_type=jnp.float32)
            + bq_ref[...]).astype(jnp.bfloat16)                     # (tq, H)

    kv_all = kv_ref[...]                                            # (S, 2H) bf16
    k_bf = kv_all[:, :H]
    v_bf = kv_all[:, H:]

    # --- head-batched attention: stack lane slices along a new leading head
    #     axis (avoids lane-splitting reshapes), then batched einsums ---
    q_h = jnp.stack([q_bf[:, h * Dh:(h + 1) * Dh] for h in range(n_heads)], axis=0)
    k_h = jnp.stack([k_bf[:, h * Dh:(h + 1) * Dh] for h in range(n_heads)], axis=0)
    v_h = jnp.stack([v_bf[:, h * Dh:(h + 1) * Dh] for h in range(n_heads)], axis=0)

    s = jnp.einsum("hqd,hkd->hqk", q_h, k_h,
                   preferred_element_type=jnp.float32) * scale      # (nH, tq, S)
    s = s + add_mask                         # mask broadcast applied exactly once
    m = jnp.max(s, axis=-1, keepdims=True)
    p = jnp.exp(s - m)                       # f32 softmax
    p = p * pl.reciprocal(jnp.sum(p, axis=-1, keepdims=True), approx=True)
    ctx = jnp.einsum("hqk,hkd->hqd", p.astype(jnp.bfloat16), v_h,
                     preferred_element_type=jnp.float32)            # (nH, tq, Dh)

    # merge heads back to (tq, H); ONE full-contraction output projection
    ctx_bf = jnp.concatenate([ctx[h] for h in range(n_heads)],
                             axis=-1).astype(jnp.bfloat16)          # (tq, H)
    attn = jnp.dot(ctx_bf, wo_ref[...],
                   preferred_element_type=jnp.float32) + bo_ref[...]

    # --- residual + LN1 fused ---
    h1 = _layernorm_f32(xq + attn, ln1_g_ref[...], ln1_b_ref[...], eps)
    h1_bf = h1.astype(jnp.bfloat16)

    # --- FFN chunked over the intermediate dim (keeps (tq, chunk) live only) ---
    ffn = jnp.zeros((tq, H), jnp.float32)
    for c in range(I // ffn_chunk):
        lo = c * ffn_chunk
        hi = lo + ffn_chunk
        inter = (jnp.dot(h1_bf, w1_ref[:, lo:hi],
                         preferred_element_type=jnp.float32) + b1_ref[:, lo:hi])
        inter = _gelu_f32(inter).astype(jnp.bfloat16)
        ffn = ffn + jnp.dot(inter, w2_ref[lo:hi, :],
                            preferred_element_type=jnp.float32)
    ffn = ffn + b2_ref[...]

    # --- residual + LN2 fused ---
    h2 = _layernorm_f32(h1 + ffn, ln2_g_ref[...], ln2_b_ref[...], eps)
    o_ref[0] = h2.astype(o_ref.dtype)


def encoder_layer(x, add_mask, lyr, *, n_heads, eps=1e-12):
    """One full transformer layer in a single pallas_call; grid = (batch, q-tiles)."""
    B, S, H = x.shape
    I = lyr["w1"].shape[1]
    H2 = 2 * H
    tq = _seq_tile(S)
    fck = _ffn_chunk(I)

    kernel = functools.partial(_encoder_layer_kernel, n_heads=n_heads, eps=eps,
                               ffn_chunk=fck)
    return pl.pallas_call(
        kernel,
        out_shape=jax.ShapeDtypeStruct((B, S, H), jnp.float32),
        grid=(B, S // tq),
        in_specs=[
            pl.BlockSpec((1, tq, H), lambda b, q: (b, q, 0)),   # x q-tile (Q + residual)
            pl.BlockSpec((1, S, H), lambda b, q: (b, 0, 0)),    # x full seq (K/V source)
            pl.BlockSpec((1, 1, S), lambda b, q: (b, 0, 0)),    # additive mask
            _weight_spec((H, H)),                               # wq
            _const_spec((1, H)),                                # bq
            _weight_spec((H, H2)),                              # wkv (fused K|V)
            _const_spec((1, H2)),                               # bkv
            _weight_spec((H, H)),                               # wo
            _const_spec((1, H)),                                # bo
            _const_spec((1, H)),                                # ln1 gamma
            _const_spec((1, H)),                                # ln1 beta
            _weight_spec((H, I)),                               # w1
            _const_spec((1, I)),                                # b1
            _weight_spec((I, H)),                               # w2
            _const_spec((1, H)),                                # b2
            _const_spec((1, H)),                                # ln2 gamma
            _const_spec((1, H)),                                # ln2 beta
        ],
        out_specs=pl.BlockSpec((1, tq, H), lambda b, q: (b, q, 0)),
        scratch_shapes=[pltpu.VMEM((S, H2), jnp.bfloat16)],     # per-batch K/V cache
        compiler_params=pltpu.CompilerParams(
            dimension_semantics=("parallel", "arbitrary"),
            vmem_limit_bytes=_vmem_limit_bytes()),
    )(x, x, add_mask, lyr["wq"], lyr["bq"], lyr["wkv"], lyr["bkv"],
      lyr["wo"], lyr["bo"], lyr["ln1_g"], lyr["ln1_b"],
      lyr["w1"], lyr["b1"], lyr["w2"], lyr["b2"], lyr["ln2_g"], lyr["ln2_b"])


def _pooler_head_kernel(x_ref, pw_ref, pb_ref, ow_ref, ob_ref, o_ref):
    # CLS extraction fused into the kernel (only the first sublane tile of x
    # is brought into VMEM by the BlockSpec).
    cls = x_ref[...][:, 0, :].astype(jnp.bfloat16)                  # (B, H)
    pooled = jnp.dot(cls, pw_ref[...],
                     preferred_element_type=jnp.float32) + pb_ref[...]
    pooled = jnp.tanh(pooled)                                       # BERT pooler act, f32
    # TODO(synk): nn.Dropout(p=0.3) is identity at inference; no RNG mask applied.
    logits = jnp.dot(pooled.astype(jnp.bfloat16), ow_ref[...],
                     preferred_element_type=jnp.float32) + ob_ref[...]
    o_ref[...] = logits                                             # lane-dense (B, 128)


def pooler_classifier(x, pool_w, pool_b, out_w_pad, out_b_pad, *, n_classes):
    """Fused CLS-slice + pooler + classifier; output padded to 128 lanes."""
    B, S, H = x.shape
    npad = out_w_pad.shape[1]
    t_cls = 8 if S % 8 == 0 else S           # only the sublane tile holding CLS
    logits_pad = pl.pallas_call(
        _pooler_head_kernel,
        out_shape=jax.ShapeDtypeStruct((B, npad), jnp.float32),
        in_specs=[
            pl.BlockSpec((B, t_cls, H), lambda: (0, 0, 0)),
            pl.BlockSpec((H, H), lambda: (0, 0)),
            pl.BlockSpec((1, H), lambda: (0, 0)),
            pl.BlockSpec((H, npad), lambda: (0, 0)),
            pl.BlockSpec((1, npad), lambda: (0, 0)),
        ],
        out_specs=pl.BlockSpec((B, npad), lambda: (0, 0)),
    )(x, pool_w, pool_b, out_w_pad, out_b_pad)
    return logits_pad[:, :n_classes]


# ------------------------- synthetic BERT + head ----------------------------

CFG = dict(vocab=64, max_pos=16, type_vocab=2, hidden=32, layers=2,
           heads=2, intermediate=64, n_classes=3)


def init_params(key, cfg=CFG):
    """Raw (PyTorch-layout) parameters with deterministic synthetic init."""
    H, I = cfg["hidden"], cfg["intermediate"]
    std = 0.02
    ks = iter(jax.random.split(key, 8 + 16 * cfg["layers"]))

    def nrm(shape):
        return std * jax.random.normal(next(ks), shape, jnp.float32)

    p = {
        "word_emb": nrm((cfg["vocab"], H)),
        "pos_emb": nrm((cfg["max_pos"], H)),
        "type_emb": nrm((cfg["type_vocab"], H)),
        "emb_ln_g": jnp.ones((H,), jnp.float32),
        "emb_ln_b": jnp.zeros((H,), jnp.float32),
        "layers": [],
        "pool_w": nrm((H, H)),
        "pool_b": jnp.zeros((H,), jnp.float32),
        "out_w": nrm((H, cfg["n_classes"])),
        "out_b": jnp.zeros((cfg["n_classes"],), jnp.float32),
    }
    for _ in range(cfg["layers"]):
        p["layers"].append({
            "wq": nrm((H, H)), "bq": jnp.zeros((H,), jnp.float32),
            "wk": nrm((H, H)), "bk": jnp.zeros((H,), jnp.float32),
            "wv": nrm((H, H)), "bv": jnp.zeros((H,), jnp.float32),
            "wo": nrm((H, H)), "bo": jnp.zeros((H,), jnp.float32),
            "ln1_g": jnp.ones((H,), jnp.float32), "ln1_b": jnp.zeros((H,), jnp.float32),
            "w1": nrm((H, I)), "b1": jnp.zeros((I,), jnp.float32),
            "w2": nrm((I, H)), "b2": jnp.zeros((H,), jnp.float32),
            "ln2_g": jnp.ones((H,), jnp.float32), "ln2_b": jnp.zeros((H,), jnp.float32),
        })
    return p


def prepare_params(p):
    """One-time device prep: keep Q separate (q-tiled path), fuse K|V into one
    (H, 2H) weight, cast matmul weights to bf16 (MXU operands), keep biases /
    LN params as (1, N) f32, and pad the classifier to a lane-dense (H, 128)
    output."""
    n_classes = p["out_w"].shape[1]
    npad = ((n_classes + 127) // 128) * 128

    def row(v):
        return v.reshape(1, -1).astype(jnp.float32)

    dp = {
        "word_emb": p["word_emb"],
        "pos_emb": p["pos_emb"],
        "type_emb": p["type_emb"],
        "emb_ln_g": row(p["emb_ln_g"]), "emb_ln_b": row(p["emb_ln_b"]),
        "pool_w": p["pool_w"].astype(jnp.bfloat16), "pool_b": row(p["pool_b"]),
        "out_w": jnp.pad(p["out_w"], ((0, 0), (0, npad - n_classes))).astype(jnp.bfloat16),
        "out_b": jnp.pad(p["out_b"], (0, npad - n_classes)).reshape(1, npad).astype(jnp.float32),
        "layers": [],
    }
    for l in p["layers"]:
        dp["layers"].append({
            "wq": l["wq"].astype(jnp.bfloat16), "bq": row(l["bq"]),
            "wkv": jnp.concatenate([l["wk"], l["wv"]], axis=1).astype(jnp.bfloat16),
            "bkv": jnp.concatenate([l["bk"], l["bv"]]).reshape(1, -1).astype(jnp.float32),
            "wo": l["wo"].astype(jnp.bfloat16), "bo": row(l["bo"]),
            "ln1_g": row(l["ln1_g"]), "ln1_b": row(l["ln1_b"]),
            "w1": l["w1"].astype(jnp.bfloat16), "b1": row(l["b1"]),
            "w2": l["w2"].astype(jnp.bfloat16), "b2": row(l["b2"]),
            "ln2_g": row(l["ln2_g"]), "ln2_b": row(l["ln2_b"]),
        })
    return dp


def sentiment_classifier_forward(params, input_ids, attention_mask, cfg=CFG):
    B, S = input_ids.shape
    H, Hn = cfg["hidden"], cfg["heads"]
    assert S <= cfg["max_pos"], "sequence length exceeds position-embedding table"
    BS = B * S

    # --- BERT embeddings: gathers are XLA glue; add + layernorm in Pallas ---
    word = jnp.take(params["word_emb"], input_ids, axis=0)            # (B,S,H)
    pos = params["pos_emb"][:S][None, :, :]                           # (1,S,H)
    tok = params["type_emb"][0][None, None, :]                        # token_type_ids == 0
    emb = (word + pos + tok).astype(jnp.float32).reshape(BS, H)
    x = layernorm(emb, params["emb_ln_g"], params["emb_ln_b"]).reshape(B, S, H)  # f32 carry

    # additive attention mask, kept in f32 for the softmax
    add_mask = ((1.0 - attention_mask.astype(jnp.float32)) * -1e9).reshape(B, 1, S)

    # --- encoder: one fused pallas_call per layer, (batch, q-tile) grid ---
    for lyr in params["layers"]:
        x = encoder_layer(x, add_mask, lyr, n_heads=Hn)

    # --- BERT pooler + dropout(identity) + classifier head, fused (CLS slice
    #     happens inside the kernel) ---
    return pooler_classifier(x, params["pool_w"], params["pool_b"],
                             params["out_w"], params["out_b"],
                             n_classes=cfg["n_classes"])


if __name__ == "__main__":
    key = jax.random.PRNGKey(0)
    k_param, k_ids = jax.random.split(key)

    B, S = 2, 8
    params = prepare_params(init_params(k_param))
    input_ids = jax.random.randint(k_ids, (B, S), 0, CFG["vocab"], dtype=jnp.int32)
    attention_mask = jnp.array(
        [[1, 1, 1, 1, 1, 1, 1, 1],
         [1, 1, 1, 1, 1, 0, 0, 0]], dtype=jnp.int32)

    logits = sentiment_classifier_forward(params, input_ids, attention_mask)
    logits = jax.block_until_ready(logits)
    assert logits.shape == (B, CFG["n_classes"])
    assert bool(jnp.all(jnp.isfinite(logits)))
    print("KERNEL_OK")
</pallas_src>

<mosaic_0001>
module attributes {stable_mosaic.version = 11 : i64} {
  func.func @_layernorm_kernel(%arg0: i32, %arg1: memref<16x32xf32, #tpu.memory_space<vmem>>, %arg2: memref<1x32xf32, #tpu.memory_space<vmem>>, %arg3: memref<1x32xf32, #tpu.memory_space<vmem>>, %arg4: memref<16x32xf32, #tpu.memory_space<vmem>>) attributes {dimension_semantics = [#tpu.dimension_semantics<parallel>], iteration_bounds = array<i64: 1>, scalar_prefetch = 0 : i64, scratch_operands = 0 : i64, tpu.core_type = #tpu.core_type<tc>, window_params = [{transform_indices = @transform_0, window_bounds = array<i64: 16, 32>}, {pipeline_mode = #tpu.pipeline_mode<synchronous>, transform_indices = @transform_1, window_bounds = array<i64: 1, 32>}, {pipeline_mode = #tpu.pipeline_mode<synchronous>, transform_indices = @transform_2, window_bounds = array<i64: 1, 32>}, {transform_indices = @transform_3, window_bounds = array<i64: 16, 32>}]} {
    %c0 = arith.constant 0 : index
    %c0_0 = arith.constant 0 : index
    %0 = vector.load %arg1[%c0, %c0_0] : memref<16x32xf32, #tpu.memory_space<vmem>>, vector<16x32xf32>
    %c0_1 = arith.constant 0 : index
    %c0_2 = arith.constant 0 : index
    %1 = vector.load %arg2[%c0_1, %c0_2] : memref<1x32xf32, #tpu.memory_space<vmem>>, vector<1x32xf32>
    %c0_3 = arith.constant 0 : index
    %c0_4 = arith.constant 0 : index
    %2 = vector.load %arg3[%c0_3, %c0_4] : memref<1x32xf32, #tpu.memory_space<vmem>>, vector<1x32xf32>
    %cst = arith.constant dense<0.000000e+00> : vector<16xf32>
    %3 = vector.multi_reduction <add>, %0, %cst [1] : vector<16x32xf32> to vector<16xf32>
    %4 = vector.shape_cast %3 : vector<16xf32> to vector<16x1xf32>
    %cst_5 = arith.constant 3.200000e+01 : f32
    %5 = vector.broadcast %cst_5 : f32 to vector<16x1xf32>
    %6 = arith.divf %4, %5 : vector<16x1xf32>
    %7 = vector.broadcast %6 : vector<16x1xf32> to vector<16x32xf32>
    %8 = arith.subf %0, %7 : vector<16x32xf32>
    %9 = arith.mulf %8, %8 : vector<16x32xf32>
    %cst_6 = arith.constant dense<0.000000e+00> : vector<16xf32>
    %10 = vector.multi_reduction <add>, %9, %cst_6 [1] : vector<16x32xf32> to vector<16xf32>
    %11 = vector.shape_cast %10 : vector<16xf32> to vector<16x1xf32>
    %cst_7 = arith.constant 3.200000e+01 : f32
    %12 = vector.broadcast %cst_7 : f32 to vector<16x1xf32>
    %13 = arith.divf %11, %12 : vector<16x1xf32>
    %cst_8 = arith.constant 9.99999996E-13 : f32
    %14 = vector.broadcast %cst_8 : f32 to vector<16x1xf32>
    %15 = arith.addf %13, %14 : vector<16x1xf32>
    %16 = math.rsqrt %15 : vector<16x1xf32>
    %17 = vector.broadcast %6 : vector<16x1xf32> to vector<16x32xf32>
    %18 = arith.subf %0, %17 : vector<16x32xf32>
    %19 = vector.broadcast %16 : vector<16x1xf32> to vector<16x32xf32>
    %20 = arith.mulf %18, %19 : vector<16x32xf32>
    %21 = vector.broadcast %1 : vector<1x32xf32> to vector<16x32xf32>
    %22 = arith.mulf %20, %21 : vector<16x32xf32>
    %23 = vector.broadcast %2 : vector<1x32xf32> to vector<16x32xf32>
    %24 = arith.addf %22, %23 : vector<16x32xf32>
    %c0_9 = arith.constant 0 : index
    %c0_10 = arith.constant 0 : index
    %25 = vector.load %arg4[%c0_9, %c0_10] : memref<16x32xf32, #tpu.memory_space<vmem>>, vector<16x32xf32>
    tpu.vector_store %arg4[%c0_9, %c0_10], %24 {strides = array<i32>} : memref<16x32xf32, #tpu.memory_space<vmem>>, vector<16x32xf32>,
    return
  }
  func.func @transform_0(%arg0: i32) -> (i32, i32) {
    %c0_i32 = arith.constant 0 : i32
    %c0_i32_0 = arith.constant 0 : i32
    return %arg0, %c0_i32 : i32, i32
  }
  func.func @transform_1(%arg0: i32) -> (i32, i32) {
    %c0_i32 = arith.constant 0 : i32
    %c0_i32_0 = arith.constant 0 : i32
    %c0_i32_1 = arith.constant 0 : i32
    return %c0_i32, %c0_i32_0 : i32, i32
  }
  func.func @transform_2(%arg0: i32) -> (i32, i32) {
    %c0_i32 = arith.constant 0 : i32
    %c0_i32_0 = arith.constant 0 : i32
    %c0_i32_1 = arith.constant 0 : i32
    return %c0_i32, %c0_i32_0 : i32, i32
  }
  func.func @transform_3(%arg0: i32) -> (i32, i32) {
    %c0_i32 = arith.constant 0 : i32
    %c0_i32_0 = arith.constant 0 : i32
    return %arg0, %c0_i32 : i32, i32
  }
}

</mosaic_0001>

<llo_original>
// kernel: tpu_custom_call.1
$region0: #{tpu_custom_call.1}
  #allocation0 [shape = 'u32[]', space=smem, size = 0x4, offset = 0x4, fixed_abs, tag = 'smem constant byte address 0x4 - core index']
  #allocation1 [shape = 'u32[144,128]{1,0:T(1,128)}', space=vmem, size = 0x12000, scoped, tag = 'internal scratch']
  %s0 = inlined_call_operand.hbm [shape: f32[16,32], index: 0, kind: input, shape index: {}]
  %s1 = inlined_call_operand.vmem [shape: f32[1,32], index: 1, kind: input, shape index: {}]
  %s2 = inlined_call_operand.vmem [shape: f32[1,32], index: 2, kind: input, shape index: {}]
  %s3 = inlined_call_operand.hbm [shape: f32[16,32], index: 3, kind: output, shape index: {}]
  %s4 = sld [smem:[#allocation0]]
  $region26: #{tpu_custom_call.1} parent=0
    _
  %s6 = ssub.s32 1, %s4
  %s7 = scalar_select 0, %s6, %s4
  $region1: #{tpu_custom_call.1} parent=0
    #allocation2 [shape = 'u8[8192]{0}', space=vmem, size = 0x2000, scoped, tag = 'input window, operand 0, single buffered']
    #allocation3 [shape = 's32[1]{0}', space=sflag, size = 0x4, scoped, tag = 'scoped memory for tpu_custom_call.1']
    #allocation4 [shape = 's32[1]{0}', space=sflag, size = 0x4, scoped, tag = 'scoped memory for tpu_custom_call.1']
    #allocation5 [shape = 'u8[8192]{0}', space=vmem, size = 0x2000, scoped, tag = 'output window, operand 0, single buffered']
    %8 = vsyncpa [#allocation3], 0
    %9 = vsyncpa [#allocation4], 0
    // Predicated region
    $region2: #{tpu_custom_call.1} parent=1 // pred_check
      _
    $region3: #{tpu_custom_call.1} parent=1 // pred_check_branch
      %11 = sbr.rel (0) target = $region5
    $region4: #{tpu_custom_call.1} parent=1 // pred_region
      %s13 = ssub.s32 256, 256
      %14 = vsyncadd [#allocation3], %s13
      %s15 = sshll.u32 [#allocation2], 4
      %s16 = int_to_ptr.vmem [resolvable:$true] %s15
      %21 = dma.hbm_to_vmem [thread:$0]  %s0, 256, %s16, [#allocation3], 128, 128, 8
    $region5: #{tpu_custom_call.1} parent=1 // pred_fallthru
      _
    // Predicated region
    $region6: #{tpu_custom_call.1} parent=1 // pred_check
      _
    $region7: #{tpu_custom_call.1} parent=1 // pred_check_branch
      %23 = sbr.rel (0) target = $region9
    $region8: #{tpu_custom_call.1} parent=1 // pred_region
      _
    $region9: #{tpu_custom_call.1} parent=1 // pred_fallthru
      _
    // Predicated region
    $region10: #{tpu_custom_call.1} parent=1 // pred_check
      _
    $region11: #{tpu_custom_call.1} parent=1 // pred_check_branch
      %25 = sbr.rel (0) target = $region13
    $region12: #{tpu_custom_call.1} parent=1 // pred_region
      _
    $region13: #{tpu_custom_call.1} parent=1 // pred_fallthru
      _
    // Predicated region
    $region14: #{tpu_custom_call.1} parent=1 // pred_check
      _
    $region15: #{tpu_custom_call.1} parent=1 // pred_check_branch
      %27 = sbr.rel (0) target = $region17
    $region16: #{tpu_custom_call.1} parent=1 // pred_region
      %28 = dma.done [#allocation3], 256
    $region17: #{tpu_custom_call.1} parent=1 // pred_fallthru
      _
    %v29 = vld [vmem:[#allocation2] sm:$0xff]
    %v30 = vld [vmem:[#allocation2 + $0x8] sm:$0xff]
    %v31 = vld [vmem:[%s1] sm:$0x1]
    %v32 = vld [vmem:[%s2] sm:$0x1]
    %vm33 = vcmask 261120
    %v34 = vsel %vm33, %v29, 0.0
    %35 = vadd.xlane.f32.xlu0 %v34
    %v36 = vpop.xlane.xlu0 %35
    %v37 = vsel %vm33, %v30, 0.0
    %38 = vadd.xlane.f32.xlu0 %v37
    %v39 = vpop.xlane.xlu0 %38
    %v40 = vrcp.pop 32.0
    %v41 = vmul.f32 %v36, %v40
    %v42 = vmul.f32 %v39, %v40
    %v43 = vsub.f32 %v29, %v41
    %v44 = vsub.f32 %v30, %v42
    %v45 = vmul.f32 %v43, %v43
    %v46 = vmul.f32 %v44, %v44
    %v47 = vsel %vm33, %v45, 0.0
    %48 = vadd.xlane.f32.xlu0 %v47
    %v49 = vpop.xlane.xlu0 %48
    %v50 = vsel %vm33, %v46, 0.0
    %51 = vadd.xlane.f32.xlu0 %v50
    %v52 = vpop.xlane.xlu0 %51
    %v53 = vmul.f32 %v49, %v40
    %v54 = vmul.f32 %v52, %v40
    %v55 = vadd.f32 %v53, 1e-12
    %v56 = vadd.f32 %v54, 1e-12
    %v57 = vrsqrt.pop %v55
    %v58 = vrsqrt.pop %v56
    %v59 = vmul.f32 %v43, %v57
    %v60 = vmul.f32 %v44, %v58
    %v62 = vlaneseq
    %v63 = vshrl.u32 %v62, 7
    %v64 = vsub.s32 0, %v63
    %v65 = vrot.slane %v31, %v64
    %v67 = vmul.f32 %v59, %v65
    %v68 = vmul.f32 %v60, %v65
    %v70 = vlaneseq
    %v71 = vshrl.u32 %v70, 7
    %v72 = vsub.s32 0, %v71
    %v73 = vrot.slane %v32, %v72
    %v75 = vadd.f32 %v67, %v73
    %v76 = vadd.f32 %v68, %v73
    %77 = vst.msk [vmem:[#allocation5] sm:$0xff] %vm33, %v75
    %78 = vst.msk [vmem:[#allocation5 + $0x8] sm:$0xff] %vm33, %v76
    // Predicated region
    $region18: #{tpu_custom_call.1} parent=1 // pred_check
      _
    $region19: #{tpu_custom_call.1} parent=1 // pred_check_branch
      %80 = sbr.rel (0) target = $region21
    $region20: #{tpu_custom_call.1} parent=1 // pred_region
      %s82 = ssub.s32 256, 256
      %83 = vsyncadd [#allocation4], %s82
      %s84 = sshll.u32 [#allocation5], 4
      %s85 = int_to_ptr.vmem [resolvable:$true] %s84
      %90 = dma.vmem_to_hbm [thread:$0]  %s85, 256, %s3, [#allocation4], 128, 128, 8
    $region21: #{tpu_custom_call.1} parent=1 // pred_fallthru
      _
    // Predicated region
    $region22: #{tpu_custom_call.1} parent=1 // pred_check
      _
    $region23: #{tpu_custom_call.1} parent=1 // pred_check_branch
      %92 = sbr.rel (0) target = $region25
    $region24: #{tpu_custom_call.1} parent=1 // pred_region
      %93 = dma.done [#allocation4], 256
    $region25: #{tpu_custom_call.1} parent=1 // pred_fallthru
      _
    %94 = vsyncpa [#allocation3], 1
    %95 = vsyncpa [#allocation4], 1

</llo_original>
